<compile_context>
chip_gen: v5e
topology: v5e:2x2
jax: 0.10.0
libtpu: 0.0.40
codegen_flags: <defaults>
</compile_context>

<pallas_src>
import functools

import jax
import jax.numpy as jnp
import numpy as np
from jax.experimental import pallas as pl
from jax.experimental.pallas import tpu as pltpu

_LANES = 128
# VMEM budget for double-buffered input tiles (2 inputs x 2 pipeline buffers),
# kept well below the physical VMEM of every generation (64 MiB/TC on v7x).
_TILE_BYTES_BUDGET = 16 * 1024 * 1024
_MAX_TILE_ROWS = 4096


def _pick_tile(n, cap):
    """Largest tile t <= cap with n % t == 0 and (t % 8 == 0 or t == n)."""
    if n <= cap:
        return n
    t = (cap // 8) * 8
    while t >= 8:
        if n % t == 0:
            return t
        t -= 8
    # No sublane-aligned divisor of n: fall back to a single full-array block.
    # TODO(synk): pad the batch to a multiple of 8 to tile arbitrary ragged B.
    return n


def _gmf_packed_kernel(u_ref, i_ref, ones_ref, o_ref):
    # u_ref, i_ref : (tr, 128) lane-packed feature tiles (each 128-lane row
    #                holds G = 128//D consecutive batch rows).
    # ones_ref     : (128, G) block-of-ones reduction matrix (lane l -> col l//D).
    # o_ref        : (tr, G) sigmoid(dot product) per packed batch row.
    prod = u_ref[...].astype(jnp.float32) * i_ref[...].astype(jnp.float32)
    sums = jnp.dot(prod, ones_ref[...],
                   preferred_element_type=jnp.float32,
                   precision=jax.lax.Precision.HIGHEST)
    o_ref[...] = jax.nn.sigmoid(sums).astype(o_ref.dtype)


def _gmf_rows_kernel(u_ref, i_ref, o_ref):
    # Fallback: u_ref, i_ref : (tb, D) tiles; o_ref : (tb, 1).
    prod = u_ref[...].astype(jnp.float32) * i_ref[...].astype(jnp.float32)
    s = jnp.sum(prod, axis=1, keepdims=True)
    o_ref[...] = jax.nn.sigmoid(s).astype(o_ref.dtype)


def gmf_forward(user_feature, item_feature, *, vmem_limit_bytes=64 * 1024 * 1024):
    """Pallas GMF forward. user_feature/item_feature: (B, D). Returns (B,) f32."""
    assert user_feature.shape == item_feature.shape
    B, D = user_feature.shape

    compiler_params = pltpu.CompilerParams(
        dimension_semantics=("parallel",),
        vmem_limit_bytes=vmem_limit_bytes,
    )

    if D <= _LANES and _LANES % D == 0 and B % (_LANES // D) == 0:
        # ------------------ lane-packed fast path ------------------------
        G = _LANES // D                  # batch rows packed per 128-lane row
        R = B // G                       # packed rows
        u_p = user_feature.reshape(R, _LANES)
        i_p = item_feature.reshape(R, _LANES)
        # Static block-of-ones reduction matrix: lane l contributes to column l//D.
        ones_blk = jnp.asarray(
            (np.arange(_LANES)[:, None] // D == np.arange(G)[None, :])
            .astype(np.float32))

        row_bytes = 2 * 2 * _LANES * 4   # 2 inputs x 2 pipeline buffers, f32
        cap = max(8, min(_MAX_TILE_ROWS, _TILE_BYTES_BUDGET // row_bytes))
        tr = _pick_tile(R, cap)

        out = pl.pallas_call(
            _gmf_packed_kernel,
            out_shape=jax.ShapeDtypeStruct((R, G), jnp.float32),
            grid_spec=pltpu.PrefetchScalarGridSpec(
                num_scalar_prefetch=0,
                grid=(R // tr,),
                in_specs=[
                    pl.BlockSpec((tr, _LANES), lambda r: (r, 0)),
                    pl.BlockSpec((tr, _LANES), lambda r: (r, 0)),
                    pl.BlockSpec((_LANES, G), lambda r: (0, 0)),
                ],
                out_specs=pl.BlockSpec((tr, G), lambda r: (r, 0)),
            ),
            compiler_params=compiler_params,
        )(u_p, i_p, ones_blk)
        # Packed row r, column g  <->  batch row r*G + g  (row-major), so a
        # plain reshape restores batch order.
        return out.reshape(B)

    # ------------------ generic fallback path (irregular D) --------------
    row_bytes = 2 * 2 * D * 4
    cap = max(8, min(_MAX_TILE_ROWS, _TILE_BYTES_BUDGET // max(row_bytes, 1)))
    tb = _pick_tile(B, cap)

    out = pl.pallas_call(
        _gmf_rows_kernel,
        out_shape=jax.ShapeDtypeStruct((B, 1), jnp.float32),
        grid_spec=pltpu.PrefetchScalarGridSpec(
            num_scalar_prefetch=0,
            grid=(B // tb,),
            in_specs=[
                pl.BlockSpec((tb, D), lambda b: (b, 0)),
                pl.BlockSpec((tb, D), lambda b: (b, 0)),
            ],
            out_specs=pl.BlockSpec((tb, 1), lambda b: (b, 0)),
        ),
        compiler_params=compiler_params,
    )(user_feature, item_feature)
    return out[:, 0]


if __name__ == "__main__":
    # Module has no parameters (sigmoid only); inputs are the embeddings.
    key = jax.random.PRNGKey(0)

    # Main check: lane-packed fast path (D=32 -> 4 batch rows per 128-lane row).
    B, D = 8, 32
    x = jax.random.normal(key, (2, B, D), dtype=jnp.float32)  # x[0]=user, x[1]=item
    result = gmf_forward(x[0], x[1])
    jax.block_until_ready(result)
    ref = jax.nn.sigmoid(jnp.sum(x[0] * x[1], axis=1))
    assert result.shape == (B,)
    assert jnp.allclose(result, ref, atol=1e-5, rtol=1e-5)

    # Secondary check: irregular feature dim exercises the fallback path.
    B2, D2 = 16, 20
    y = jax.random.normal(jax.random.PRNGKey(1), (2, B2, D2), dtype=jnp.float32)
    result2 = gmf_forward(y[0], y[1])
    jax.block_until_ready(result2)
    ref2 = jax.nn.sigmoid(jnp.sum(y[0] * y[1], axis=1))
    assert result2.shape == (B2,)
    assert jnp.allclose(result2, ref2, atol=1e-5, rtol=1e-5)

    print("KERNEL_OK")
</pallas_src>

<mosaic_0001>
module attributes {stable_mosaic.version = 11 : i64} {
  func.func @_gmf_packed_kernel(%arg0: i32, %arg1: memref<2x128xf32, #tpu.memory_space<vmem>>, %arg2: memref<2x128xf32, #tpu.memory_space<vmem>>, %arg3: memref<128x4xf32, #tpu.memory_space<vmem>>, %arg4: memref<2x4xf32, #tpu.memory_space<vmem>>) attributes {dimension_semantics = [#tpu.dimension_semantics<parallel>], iteration_bounds = array<i64: 1>, scalar_prefetch = 0 : i64, scratch_operands = 0 : i64, tpu.core_type = #tpu.core_type<tc>, window_params = [{transform_indices = @transform_0, window_bounds = array<i64: 2, 128>}, {transform_indices = @transform_1, window_bounds = array<i64: 2, 128>}, {pipeline_mode = #tpu.pipeline_mode<synchronous>, transform_indices = @transform_2, window_bounds = array<i64: 128, 4>}, {transform_indices = @transform_3, window_bounds = array<i64: 2, 4>}]} {
    %c0 = arith.constant 0 : index
    %c0_0 = arith.constant 0 : index
    %0 = vector.load %arg1[%c0, %c0_0] : memref<2x128xf32, #tpu.memory_space<vmem>>, vector<2x128xf32>
    %c0_1 = arith.constant 0 : index
    %c0_2 = arith.constant 0 : index
    %1 = vector.load %arg2[%c0_1, %c0_2] : memref<2x128xf32, #tpu.memory_space<vmem>>, vector<2x128xf32>
    %2 = arith.mulf %0, %1 : vector<2x128xf32>
    %c0_3 = arith.constant 0 : index
    %c0_4 = arith.constant 0 : index
    %3 = vector.load %arg3[%c0_3, %c0_4] : memref<128x4xf32, #tpu.memory_space<vmem>>, vector<128x4xf32>
    %cst = arith.constant dense<0.000000e+00> : vector<2x4xf32>
    %4 = tpu.matmul %2, %3, %cst {dimension_numbers = #tpu.dot_dimension_numbers<[1], [0], [0], [1], [0, 0, 1, 1], [], []>, precision = #tpu.contract_precision<fp32>} : vector<2x128xf32>, vector<128x4xf32>, vector<2x4xf32> -> vector<2x4xf32>
    %5 = arith.negf %4 : vector<2x4xf32>
    %6 = math.exp %5 : vector<2x4xf32>
    %cst_5 = arith.constant 1.000000e+00 : f32
    %7 = vector.broadcast %cst_5 : f32 to vector<2x4xf32>
    %8 = arith.addf %7, %6 : vector<2x4xf32>
    %9 = arith.divf %7, %8 : vector<2x4xf32>
    %c0_6 = arith.constant 0 : index
    %c0_7 = arith.constant 0 : index
    %10 = vector.load %arg4[%c0_6, %c0_7] : memref<2x4xf32, #tpu.memory_space<vmem>>, vector<2x4xf32>
    tpu.vector_store %arg4[%c0_6, %c0_7], %9 {strides = array<i32>} : memref<2x4xf32, #tpu.memory_space<vmem>>, vector<2x4xf32>,
    return
  }
  func.func @transform_0(%arg0: i32) -> (i32, i32) {
    %c0_i32 = arith.constant 0 : i32
    %c0_i32_0 = arith.constant 0 : i32
    return %arg0, %c0_i32 : i32, i32
  }
  func.func @transform_1(%arg0: i32) -> (i32, i32) {
    %c0_i32 = arith.constant 0 : i32
    %c0_i32_0 = arith.constant 0 : i32
    return %arg0, %c0_i32 : i32, i32
  }
  func.func @transform_2(%arg0: i32) -> (i32, i32) {
    %c0_i32 = arith.constant 0 : i32
    %c0_i32_0 = arith.constant 0 : i32
    %c0_i32_1 = arith.constant 0 : i32
    return %c0_i32, %c0_i32_0 : i32, i32
  }
  func.func @transform_3(%arg0: i32) -> (i32, i32) {
    %c0_i32 = arith.constant 0 : i32
    %c0_i32_0 = arith.constant 0 : i32
    return %arg0, %c0_i32 : i32, i32
  }
}

</mosaic_0001>

<llo_original>
// kernel: tpu_custom_call.1
$region0: #{tpu_custom_call.1}
  #allocation0 [shape = 'u32[]', space=smem, size = 0x4, offset = 0x4, fixed_abs, tag = 'smem constant byte address 0x4 - core index']
  #allocation1 [shape = 'u32[72,128]{1,0:T(1,128)}', space=vmem, size = 0x9000, scoped, tag = 'internal scratch']
  %s0 = inlined_call_operand.vmem [shape: f32[2,128], index: 0, kind: input, shape index: {}]
  %s1 = inlined_call_operand.vmem [shape: f32[2,128], index: 1, kind: input, shape index: {}]
  %s2 = inlined_call_operand.vmem [shape: f32[128,4], index: 2, kind: input, shape index: {}]
  %s3 = inlined_call_operand.hbm [shape: f32[2,4], index: 3, kind: output, shape index: {}]
  %s4 = sld [smem:[#allocation0]]
  $region22: #{tpu_custom_call.1} parent=0
    _
  %s6 = ssub.s32 1, %s4
  %s7 = scalar_select 0, %s6, %s4
  $region1: #{tpu_custom_call.1} parent=0
    #allocation2 [shape = 'u8[1024]{0}', space=vmem, size = 0x400, scoped, tag = 'output window, operand 0, single buffered']
    #allocation3 [shape = 's32[1]{0}', space=sflag, size = 0x4, scoped, tag = 'scoped memory for tpu_custom_call.1']
    %8 = vsyncpa [#allocation3], 0
    // Predicated region
    $region2: #{tpu_custom_call.1} parent=1 // pred_check
      _
    $region3: #{tpu_custom_call.1} parent=1 // pred_check_branch
      %10 = sbr.rel (0) target = $region5
    $region4: #{tpu_custom_call.1} parent=1 // pred_region
      _
    $region5: #{tpu_custom_call.1} parent=1 // pred_fallthru
      _
    // Predicated region
    $region6: #{tpu_custom_call.1} parent=1 // pred_check
      _
    $region7: #{tpu_custom_call.1} parent=1 // pred_check_branch
      %12 = sbr.rel (0) target = $region9
    $region8: #{tpu_custom_call.1} parent=1 // pred_region
      _
    $region9: #{tpu_custom_call.1} parent=1 // pred_fallthru
      _
    // Predicated region
    $region10: #{tpu_custom_call.1} parent=1 // pred_check
      _
    $region11: #{tpu_custom_call.1} parent=1 // pred_check_branch
      %14 = sbr.rel (0) target = $region13
    $region12: #{tpu_custom_call.1} parent=1 // pred_region
      _
    $region13: #{tpu_custom_call.1} parent=1 // pred_fallthru
      _
    %v15 = vld [vmem:[%s0] sm:$0x3]
    %v16 = vld [vmem:[%s1] sm:$0x3]
    %v17 = vmul.f32 %v15, %v16
    %v18 = vld [vmem:[%s2] sm:$0xff]
    %v19 = vld [vmem:[%s2 + $0x8] sm:$0xff]
    %v20 = vld [vmem:[%s2 + $0x10] sm:$0xff]
    %v21 = vld [vmem:[%s2 + $0x18] sm:$0xff]
    %v22 = vld [vmem:[%s2 + $0x20] sm:$0xff]
    %v23 = vld [vmem:[%s2 + $0x28] sm:$0xff]
    %v24 = vld [vmem:[%s2 + $0x30] sm:$0xff]
    %v25 = vld [vmem:[%s2 + $0x38] sm:$0xff]
    %v26 = vld [vmem:[%s2 + $0x40] sm:$0xff]
    %v27 = vld [vmem:[%s2 + $0x48] sm:$0xff]
    %v28 = vld [vmem:[%s2 + $0x50] sm:$0xff]
    %v29 = vld [vmem:[%s2 + $0x58] sm:$0xff]
    %v30 = vld [vmem:[%s2 + $0x60] sm:$0xff]
    %v31 = vld [vmem:[%s2 + $0x68] sm:$0xff]
    %v32 = vld [vmem:[%s2 + $0x70] sm:$0xff]
    %v33 = vld [vmem:[%s2 + $0x78] sm:$0xff]
    %v34 = vand.u32 %v33, 4294901760
    %35 = vmatpush.msra.mxu0 %v34
    %v36 = vand.u32 %v32, 4294901760
    %37 = vmatpush.msra.mxu0 %v36
    %v38 = vand.u32 %v31, 4294901760
    %39 = vmatpush.msra.mxu0 %v38
    %v40 = vand.u32 %v30, 4294901760
    %41 = vmatpush.msra.mxu0 %v40
    %v42 = vand.u32 %v29, 4294901760
    %43 = vmatpush.msra.mxu0 %v42
    %v44 = vand.u32 %v28, 4294901760
    %45 = vmatpush.msra.mxu0 %v44
    %v46 = vand.u32 %v27, 4294901760
    %47 = vmatpush.msra.mxu0 %v46
    %v48 = vand.u32 %v26, 4294901760
    %49 = vmatpush.msra.mxu0 %v48
    %v50 = vand.u32 %v25, 4294901760
    %51 = vmatpush.msra.mxu0 %v50
    %v52 = vand.u32 %v24, 4294901760
    %53 = vmatpush.msra.mxu0 %v52
    %v54 = vand.u32 %v23, 4294901760
    %55 = vmatpush.msra.mxu0 %v54
    %v56 = vand.u32 %v22, 4294901760
    %57 = vmatpush.msra.mxu0 %v56
    %v58 = vand.u32 %v21, 4294901760
    %59 = vmatpush.msra.mxu0 %v58
    %v60 = vand.u32 %v20, 4294901760
    %61 = vmatpush.msra.mxu0 %v60
    %v62 = vand.u32 %v19, 4294901760
    %63 = vmatpush.msra.mxu0 %v62
    %v64 = vand.u32 %v18, 4294901760
    %65 = vmatpush.msra.mxu0 %v64
    %v66 = vand.u32 %v17, 4294901760
    %v67 = vsub.f32 %v17, %v66
    %v68 = vand.u32 %v67, 4294901760
    %v69 = vsub.f32 %v67, %v68
    %v70 = vand.u32 %v69, 4294901760
    %71 = vmatmul.f32.gmra.mxu0 %v70
    %v72 = vpop.f32.mrf.mxu0
    %v73 = vadd.f32 0.0, %v72
    %74 = vdwg.mxu0
    %v75 = vand.u32 %v33, 4294901760
    %v76 = vsub.f32 %v33, %v75
    %v77 = vand.u32 %v76, 4294901760
    %v78 = vsub.f32 %v76, %v77
    %v79 = vand.u32 %v78, 4294901760
    %80 = vmatpush.msra.mxu0 %v79
    %v81 = vand.u32 %v32, 4294901760
    %v82 = vsub.f32 %v32, %v81
    %v83 = vand.u32 %v82, 4294901760
    %v84 = vsub.f32 %v82, %v83
    %v85 = vand.u32 %v84, 4294901760
    %86 = vmatpush.msra.mxu0 %v85
    %v87 = vand.u32 %v31, 4294901760
    %v88 = vsub.f32 %v31, %v87
    %v89 = vand.u32 %v88, 4294901760
    %v90 = vsub.f32 %v88, %v89
    %v91 = vand.u32 %v90, 4294901760
    %92 = vmatpush.msra.mxu0 %v91
    %v93 = vand.u32 %v30, 4294901760
    %v94 = vsub.f32 %v30, %v93
    %v95 = vand.u32 %v94, 4294901760
    %v96 = vsub.f32 %v94, %v95
    %v97 = vand.u32 %v96, 4294901760
    %98 = vmatpush.msra.mxu0 %v97
    %v99 = vand.u32 %v29, 4294901760
    %v100 = vsub.f32 %v29, %v99
    %v101 = vand.u32 %v100, 4294901760
    %v102 = vsub.f32 %v100, %v101
    %v103 = vand.u32 %v102, 4294901760
    %104 = vmatpush.msra.mxu0 %v103
    %v105 = vand.u32 %v28, 4294901760
    %v106 = vsub.f32 %v28, %v105
    %v107 = vand.u32 %v106, 4294901760
    %v108 = vsub.f32 %v106, %v107
    %v109 = vand.u32 %v108, 4294901760
    %110 = vmatpush.msra.mxu0 %v109
    %v111 = vand.u32 %v27, 4294901760
    %v112 = vsub.f32 %v27, %v111
    %v113 = vand.u32 %v112, 4294901760
    %v114 = vsub.f32 %v112, %v113
    %v115 = vand.u32 %v114, 4294901760
    %116 = vmatpush.msra.mxu0 %v115
    %v117 = vand.u32 %v26, 4294901760
    %v118 = vsub.f32 %v26, %v117
    %v119 = vand.u32 %v118, 4294901760
    %v120 = vsub.f32 %v118, %v119
    %v121 = vand.u32 %v120, 4294901760
    %122 = vmatpush.msra.mxu0 %v121
    %v123 = vand.u32 %v25, 4294901760
    %v124 = vsub.f32 %v25, %v123
    %v125 = vand.u32 %v124, 4294901760
    %v126 = vsub.f32 %v124, %v125
    %v127 = vand.u32 %v126, 4294901760
    %128 = vmatpush.msra.mxu0 %v127
    %v129 = vand.u32 %v24, 4294901760
    %v130 = vsub.f32 %v24, %v129
    %v131 = vand.u32 %v130, 4294901760
    %v132 = vsub.f32 %v130, %v131
    %v133 = vand.u32 %v132, 4294901760
    %134 = vmatpush.msra.mxu0 %v133
    %v135 = vand.u32 %v23, 4294901760
    %v136 = vsub.f32 %v23, %v135
    %v137 = vand.u32 %v136, 4294901760
    %v138 = vsub.f32 %v136, %v137
    %v139 = vand.u32 %v138, 4294901760
    %140 = vmatpush.msra.mxu0 %v139
    %v141 = vand.u32 %v22, 4294901760
    %v142 = vsub.f32 %v22, %v141
    %v143 = vand.u32 %v142, 4294901760
    %v144 = vsub.f32 %v142, %v143
    %v145 = vand.u32 %v144, 4294901760
    %146 = vmatpush.msra.mxu0 %v145
    %v147 = vand.u32 %v21, 4294901760
    %v148 = vsub.f32 %v21, %v147
    %v149 = vand.u32 %v148, 4294901760
    %v150 = vsub.f32 %v148, %v149
    %v151 = vand.u32 %v150, 4294901760
    %152 = vmatpush.msra.mxu0 %v151
    %v153 = vand.u32 %v20, 4294901760
    %v154 = vsub.f32 %v20, %v153
    %v155 = vand.u32 %v154, 4294901760
    %v156 = vsub.f32 %v154, %v155
    %v157 = vand.u32 %v156, 4294901760
    %158 = vmatpush.msra.mxu0 %v157
    %v159 = vand.u32 %v19, 4294901760
    %v160 = vsub.f32 %v19, %v159
    %v161 = vand.u32 %v160, 4294901760
    %v162 = vsub.f32 %v160, %v161
    %v163 = vand.u32 %v162, 4294901760
    %164 = vmatpush.msra.mxu0 %v163
    %v165 = vand.u32 %v18, 4294901760
    %v166 = vsub.f32 %v18, %v165
    %v167 = vand.u32 %v166, 4294901760
    %v168 = vsub.f32 %v166, %v167
    %v169 = vand.u32 %v168, 4294901760
    %170 = vmatpush.msra.mxu0 %v169
    %v171 = vand.u32 %v17, 4294901760
    %172 = vmatmul.f32.gmra.mxu0 %v171
    %v173 = vpop.f32.mrf.mxu0
    %v174 = vadd.f32 %v73, %v173
    %175 = vdwg.mxu0
    %v176 = vand.u32 %v33, 4294901760
    %v177 = vsub.f32 %v33, %v176
    %178 = vmatpush.msra.mxu0 %v177
    %v179 = vand.u32 %v32, 4294901760
    %v180 = vsub.f32 %v32, %v179
    %181 = vmatpush.msra.mxu0 %v180
    %v182 = vand.u32 %v31, 4294901760
    %v183 = vsub.f32 %v31, %v182
    %184 = vmatpush.msra.mxu0 %v183
    %v185 = vand.u32 %v30, 4294901760
    %v186 = vsub.f32 %v30, %v185
    %187 = vmatpush.msra.mxu0 %v186
    %v188 = vand.u32 %v29, 4294901760
    %v189 = vsub.f32 %v29, %v188
    %190 = vmatpush.msra.mxu0 %v189
    %v191 = vand.u32 %v28, 4294901760
    %v192 = vsub.f32 %v28, %v191
    %193 = vmatpush.msra.mxu0 %v192
    %v194 = vand.u32 %v27, 4294901760
    %v195 = vsub.f32 %v27, %v194
    %196 = vmatpush.msra.mxu0 %v195
    %v197 = vand.u32 %v26, 4294901760
    %v198 = vsub.f32 %v26, %v197
    %199 = vmatpush.msra.mxu0 %v198
    %v200 = vand.u32 %v25, 4294901760
    %v201 = vsub.f32 %v25, %v200
    %202 = vmatpush.msra.mxu0 %v201
    %v203 = vand.u32 %v24, 4294901760
    %v204 = vsub.f32 %v24, %v203
    %205 = vmatpush.msra.mxu0 %v204
    %v206 = vand.u32 %v23, 4294901760
    %v207 = vsub.f32 %v23, %v206
    %208 = vmatpush.msra.mxu0 %v207
    %v209 = vand.u32 %v22, 4294901760
    %v210 = vsub.f32 %v22, %v209
    %211 = vmatpush.msra.mxu0 %v210
    %v212 = vand.u32 %v21, 4294901760
    %v213 = vsub.f32 %v21, %v212
    %214 = vmatpush.msra.mxu0 %v213
    %v215 = vand.u32 %v20, 4294901760
    %v216 = vsub.f32 %v20, %v215
    %217 = vmatpush.msra.mxu0 %v216
    %v218 = vand.u32 %v19, 4294901760
    %v219 = vsub.f32 %v19, %v218
    %220 = vmatpush.msra.mxu0 %v219
    %v221 = vand.u32 %v18, 4294901760
    %v222 = vsub.f32 %v18, %v221
    %223 = vmatpush.msra.mxu0 %v222
    %v224 = vand.u32 %v17, 4294901760
    %v225 = vsub.f32 %v17, %v224
    %226 = vmatmul.f32.gmra.mxu0 %v225
    %v227 = vpop.f32.mrf.mxu0
    %v228 = vadd.f32 %v174, %v227
    %229 = vdwg.mxu0
    %v230 = vand.u32 %v33, 4294901760
    %231 = vmatpush.msra.mxu0 %v230
    %v232 = vand.u32 %v32, 4294901760
    %233 = vmatpush.msra.mxu0 %v232
    %v234 = vand.u32 %v31, 4294901760
    %235 = vmatpush.msra.mxu0 %v234
    %v236 = vand.u32 %v30, 4294901760
    %237 = vmatpush.msra.mxu0 %v236
    %v238 = vand.u32 %v29, 4294901760
    %239 = vmatpush.msra.mxu0 %v238
    %v240 = vand.u32 %v28, 4294901760
    %241 = vmatpush.msra.mxu0 %v240
    %v242 = vand.u32 %v27, 4294901760
    %243 = vmatpush.msra.mxu0 %v242
    %v244 = vand.u32 %v26, 4294901760
    %245 = vmatpush.msra.mxu0 %v244
    %v246 = vand.u32 %v25, 4294901760
    %247 = vmatpush.msra.mxu0 %v246
    %v248 = vand.u32 %v24, 4294901760
    %249 = vmatpush.msra.mxu0 %v248
    %v250 = vand.u32 %v23, 4294901760
    %251 = vmatpush.msra.mxu0 %v250
    %v252 = vand.u32 %v22, 4294901760
    %253 = vmatpush.msra.mxu0 %v252
    %v254 = vand.u32 %v21, 4294901760
    %255 = vmatpush.msra.mxu0 %v254
    %v256 = vand.u32 %v20, 4294901760
    %257 = vmatpush.msra.mxu0 %v256
    %v258 = vand.u32 %v19, 4294901760
    %259 = vmatpush.msra.mxu0 %v258
    %v260 = vand.u32 %v18, 4294901760
    %261 = vmatpush.msra.mxu0 %v260
    %v262 = vand.u32 %v17, 4294901760
    %v263 = vsub.f32 %v17, %v262
    %v264 = vand.u32 %v263, 4294901760
    %265 = vmatmul.f32.gmra.mxu0 %v264
    %v266 = vpop.f32.mrf.mxu0
    %v267 = vadd.f32 %v228, %v266
    %268 = vdwg.mxu0
    %v269 = vand.u32 %v33, 4294901760
    %v270 = vsub.f32 %v33, %v269
    %v271 = vand.u32 %v270, 4294901760
    %272 = vmatpush.msra.mxu0 %v271
    %v273 = vand.u32 %v32, 4294901760
    %v274 = vsub.f32 %v32, %v273
    %v275 = vand.u32 %v274, 4294901760
    %276 = vmatpush.msra.mxu0 %v275
    %v277 = vand.u32 %v31, 4294901760
    %v278 = vsub.f32 %v31, %v277
    %v279 = vand.u32 %v278, 4294901760
    %280 = vmatpush.msra.mxu0 %v279
    %v281 = vand.u32 %v30, 4294901760
    %v282 = vsub.f32 %v30, %v281
    %v283 = vand.u32 %v282, 4294901760
    %284 = vmatpush.msra.mxu0 %v283
    %v285 = vand.u32 %v29, 4294901760
    %v286 = vsub.f32 %v29, %v285
    %v287 = vand.u32 %v286, 4294901760
    %288 = vmatpush.msra.mxu0 %v287
    %v289 = vand.u32 %v28, 4294901760
    %v290 = vsub.f32 %v28, %v289
    %v291 = vand.u32 %v290, 4294901760
    %292 = vmatpush.msra.mxu0 %v291
    %v293 = vand.u32 %v27, 4294901760
    %v294 = vsub.f32 %v27, %v293
    %v295 = vand.u32 %v294, 4294901760
    %296 = vmatpush.msra.mxu0 %v295
    %v297 = vand.u32 %v26, 4294901760
    %v298 = vsub.f32 %v26, %v297
    %v299 = vand.u32 %v298, 4294901760
    %300 = vmatpush.msra.mxu0 %v299
    %v301 = vand.u32 %v25, 4294901760
    %v302 = vsub.f32 %v25, %v301
    %v303 = vand.u32 %v302, 4294901760
    %304 = vmatpush.msra.mxu0 %v303
    %v305 = vand.u32 %v24, 4294901760
    %v306 = vsub.f32 %v24, %v305
    %v307 = vand.u32 %v306, 4294901760
    %308 = vmatpush.msra.mxu0 %v307
    %v309 = vand.u32 %v23, 4294901760
    %v310 = vsub.f32 %v23, %v309
    %v311 = vand.u32 %v310, 4294901760
    %312 = vmatpush.msra.mxu0 %v311
    %v313 = vand.u32 %v22, 4294901760
    %v314 = vsub.f32 %v22, %v313
    %v315 = vand.u32 %v314, 4294901760
    %316 = vmatpush.msra.mxu0 %v315
    %v317 = vand.u32 %v21, 4294901760
    %v318 = vsub.f32 %v21, %v317
    %v319 = vand.u32 %v318, 4294901760
    %320 = vmatpush.msra.mxu0 %v319
    %v321 = vand.u32 %v20, 4294901760
    %v322 = vsub.f32 %v20, %v321
    %v323 = vand.u32 %v322, 4294901760
    %324 = vmatpush.msra.mxu0 %v323
    %v325 = vand.u32 %v19, 4294901760
    %v326 = vsub.f32 %v19, %v325
    %v327 = vand.u32 %v326, 4294901760
    %328 = vmatpush.msra.mxu0 %v327
    %v329 = vand.u32 %v18, 4294901760
    %v330 = vsub.f32 %v18, %v329
    %v331 = vand.u32 %v330, 4294901760
    %332 = vmatpush.msra.mxu0 %v331
    %v333 = vand.u32 %v17, 4294901760
    %334 = vmatmul.f32.gmra.mxu0 %v333
    %v335 = vpop.f32.mrf.mxu0
    %v336 = vadd.f32 %v267, %v335
    %337 = vdwg.mxu0
    %v338 = vand.u32 %v33, 4294901760
    %339 = vmatpush.msra.mxu0 %v338
    %v340 = vand.u32 %v32, 4294901760
    %341 = vmatpush.msra.mxu0 %v340
    %v342 = vand.u32 %v31, 4294901760
    %343 = vmatpush.msra.mxu0 %v342
    %v344 = vand.u32 %v30, 4294901760
    %345 = vmatpush.msra.mxu0 %v344
    %v346 = vand.u32 %v29, 4294901760
    %347 = vmatpush.msra.mxu0 %v346
    %v348 = vand.u32 %v28, 4294901760
    %349 = vmatpush.msra.mxu0 %v348
    %v350 = vand.u32 %v27, 4294901760
    %351 = vmatpush.msra.mxu0 %v350
    %v352 = vand.u32 %v26, 4294901760
    %353 = vmatpush.msra.mxu0 %v352
    %v354 = vand.u32 %v25, 4294901760
    %355 = vmatpush.msra.mxu0 %v354
    %v356 = vand.u32 %v24, 4294901760
    %357 = vmatpush.msra.mxu0 %v356
    %v358 = vand.u32 %v23, 4294901760
    %359 = vmatpush.msra.mxu0 %v358
    %v360 = vand.u32 %v22, 4294901760
    %361 = vmatpush.msra.mxu0 %v360
    %v362 = vand.u32 %v21, 4294901760
    %363 = vmatpush.msra.mxu0 %v362
    %v364 = vand.u32 %v20, 4294901760
    %365 = vmatpush.msra.mxu0 %v364
    %v366 = vand.u32 %v19, 4294901760
    %367 = vmatpush.msra.mxu0 %v366
    %v368 = vand.u32 %v18, 4294901760
    %369 = vmatpush.msra.mxu0 %v368
    %v370 = vand.u32 %v17, 4294901760
    %371 = vmatmul.f32.gmra.mxu0 %v370
    %v372 = vpop.f32.mrf.mxu0
    %v373 = vadd.f32 %v336, %v372
    %374 = vdwg.mxu0
    %v375 = vxor.u32 %v373, 2147483648
    %v376 = vmul.f32 %v375, 1.442695
    %v377 = vpow.pop %v376
    %v378 = vadd.f32 %v377, 1.0
    %v379 = vrcp.pop %v378
    %v380 = vmul.f32 %v378, %v379
    %v381 = vsub.f32 1.0, %v380
    %v382 = vmul.f32 %v379, %v381
    %v383 = vadd.f32 %v379, %v382
    %vm384 = vweird.f32 %v378
    %vm385 = vweird.f32 %v379
    %vm386 = vmor %vm384, %vm385
    %v387 = vsel %vm386, %v379, %v383
    %v388 = vand.u32 2147483647, %v378
    %vm389 = vcmp.eq.f32.partialorder %v388, 8.507059e+37
    %v390 = vand.u32 %v378, 2147483648
    %v391 = vor.u32 1.1754944e-38, %v390
    %v392 = vsel %vm389, %v391, %v387
    %v393 = vmul.f32 1.0, %v392
    %vm394 = vcmask 25600
    %395 = vst.msk [vmem:[#allocation2] sm:$0x3] %vm394, %v393
    // Predicated region
    $region14: #{tpu_custom_call.1} parent=1 // pred_check
      _
    $region15: #{tpu_custom_call.1} parent=1 // pred_check_branch
      %397 = sbr.rel (0) target = $region17
    $region16: #{tpu_custom_call.1} parent=1 // pred_region
      %399 = vsyncadd [#allocation3], 0
      %s401 = sshll.u32 [#allocation2], 4
      %s402 = int_to_ptr.vmem [resolvable:$true] %s401
      %s403 = sshll.u32 %s3, 4
      %s404 = int_to_ptr.hbm [resolvable:$true] %s403
      %406 = dma.vmem_to_hbm [thread:$0]  %s402, 32, %s404, [#allocation3]
    $region17: #{tpu_custom_call.1} parent=1 // pred_fallthru
      _
    // Predicated region
    $region18: #{tpu_custom_call.1} parent=1 // pred_check
      _
    $region19: #{tpu_custom_call.1} parent=1 // pred_check_branch
      %408 = sbr.rel (0) target = $region21
    $region20: #{tpu_custom_call.1} parent=1 // pred_region
      %410 = dma.done [#allocation3], 32
    $region21: #{tpu_custom_call.1} parent=1 // pred_fallthru
      _
    %411 = vsyncpa [#allocation3], 1

</llo_original>
